<compile_context>
chip_gen: v5e
topology: v5e:2x2
jax: 0.10.0
libtpu: 0.0.40
codegen_flags: <defaults>
</compile_context>

<pallas_src>
import functools

import jax
import jax.numpy as jnp
from jax.experimental import pallas as pl
from jax.experimental.pallas import tpu as pltpu


def _das_bl_kernel(emb_ref, w_ref, y_ref, yd_ref, out_ref,
                   embbf_ref, rmax_ref, rsum_ref, rtgt_ref, rarg_ref,
                   *, margin, n_classes):
    """Fused DAS_BL forward: classifier CE + acc (C-tiled) + DAS loss/dist."""
    c_idx = pl.program_id(0)
    n_tiles = pl.num_programs(0)
    B = emb_ref.shape[0]
    half = B // 2
    tile_c = w_ref.shape[-1]

    y = y_ref[...]                                        # [B, 1] int32
    lane = jax.lax.broadcasted_iota(jnp.int32, out_ref.shape, 1)

    # -------- first tile: init accumulators + DAS contrastive branch --------
    @pl.when(c_idx == 0)
    def _init():
        emb = emb_ref[...]                                # only VMEM read of emb
        embbf_ref[...] = emb.astype(jnp.bfloat16)         # hoisted MXU-operand cast
        rmax_ref[...] = jnp.full_like(rmax_ref, -jnp.inf)
        rsum_ref[...] = jnp.zeros_like(rsum_ref)
        rtgt_ref[...] = jnp.zeros_like(rtgt_ref)
        rarg_ref[...] = jnp.full_like(rarg_ref, n_classes)

        # Reference scatter-loop semantics (domain-0 rows live in [0, half),
        # later writes win; rows never assigned stay zero):
        #   main[j]   = emb[j]      if y_d[j] == 0        else 0
        #   target[j] = emb[j+half] if y_d[j+half] != 0
        #             = emb[j]      elif y_d[j] != 0
        #             = 0           otherwise
        first = emb[:half].astype(jnp.float32)
        second = emb[half:].astype(jnp.float32)
        yd0 = yd_ref[:half, :]
        yd1 = yd_ref[half:, :]
        main = jnp.where(yd0 == 0, first, 0.0)
        target = jnp.where(yd1 != 0, second, jnp.where(yd0 != 0, first, 0.0))

        # main[(i + 1) % half] via an XLU sublane rotate (free VLIW slot).
        main_next = pltpu.roll(main, shift=half - 1, axis=0)

        d_main = main - main_next
        d_tgt = main - target
        sq_main = jnp.sum(d_main * d_main, axis=-1, keepdims=True)   # [half, 1]
        sq_tgt = jnp.sum(d_tgt * d_tgt, axis=-1, keepdims=True)      # [half, 1]
        dist_main = jnp.sqrt(sq_main)
        dist_tgt = jnp.sqrt(sq_tgt)
        hinge = jnp.maximum(jnp.float32(margin) - dist_main, 0.0)
        inv_b = 1.0 / jnp.float32(B)
        # target rows use the squared distance directly (no sqrt-then-square).
        das_loss = (jnp.sum(hinge * hinge) + jnp.sum(sq_tgt)) * inv_b
        das_dist = (jnp.sum(dist_main) + jnp.sum(dist_tgt)) * inv_b

        # Resident packed output row: DAS scalars now, classifier scalars later.
        out_ref[...] = (jnp.where(lane == 2, das_loss, 0.0)
                        + jnp.where(lane == 3, das_dist, 0.0))

    # -------- every tile: one [B, tile_c] slab of logits, online LSE --------
    s = jnp.dot(embbf_ref[...], w_ref[...],
                preferred_element_type=jnp.float32)                  # [B, tile_c]
    gcol = jax.lax.broadcasted_iota(jnp.int32, s.shape, 1) + c_idx * tile_c

    m_old = rmax_ref[...]
    tile_max = jnp.max(s, axis=-1, keepdims=True)                    # [B, 1]
    # first-occurrence argmax: int32 min-reduce; strictly-greater comparison
    # against the running max keeps earlier-tile winners on exact ties.
    local_arg = jnp.min(jnp.where(s >= tile_max, gcol, n_classes),
                        axis=-1, keepdims=True)                      # [B, 1] i32
    rarg_ref[...] = jnp.where(tile_max > m_old, local_arg, rarg_ref[...])

    m_new = jnp.maximum(m_old, tile_max)
    rsum_ref[...] = (rsum_ref[...] * jnp.exp(m_old - m_new)
                     + jnp.sum(jnp.exp(s - m_new), axis=-1, keepdims=True))
    rmax_ref[...] = m_new
    rtgt_ref[...] += jnp.sum(jnp.where(gcol == y, s, 0.0),
                             axis=-1, keepdims=True)

    # -------- last tile: finalize cross-entropy + top-1 accuracy --------
    @pl.when(c_idx == n_tiles - 1)
    def _finalize():
        lse = jnp.log(rsum_ref[...]) + rmax_ref[...]                 # [B, 1]
        loss_c = jnp.mean(lse - rtgt_ref[...])
        acc = jnp.mean((rarg_ref[...] == y).astype(jnp.float32)) * 100.0
        out_ref[...] = (out_ref[...]
                        + jnp.where(lane == 0, loss_c, 0.0)
                        + jnp.where(lane == 1, acc, 0.0))


def _pick_tile_c(n_classes, max_tile):
    """Largest multiple of 128 <= max_tile dividing n_classes, else one full tile."""
    if n_classes % 128 == 0:
        t = max((min(max_tile, n_classes) // 128) * 128, 128)
        while n_classes % t != 0:
            t -= 128
        return t
    return n_classes  # off-128 C: single full-width tile (block == full dim)


def das_bl_forward(emb, y, y_d, clf_weight, *, m=2.0, max_tile_c=1024):
    """JAX/Pallas equivalent of DAS_BL.forward(emb, y, y_d).

    Returns ([loss_c, DAS_loss], [acc(%), DAS_dist_mean]).
    The synthetic spk_clf_head is a linear softmax classifier W:[D, n_classes]
    with mean cross-entropy loss and top-1 accuracy in percent.
    """
    B, D = emb.shape
    Dw, C = clf_weight.shape
    assert B % 2 == 0 and Dw == D

    # W should already be stored in bf16 (MXU-native); this is a one-time
    # fallback so callers keeping an f32 master copy still work.
    if clf_weight.dtype != jnp.bfloat16:
        clf_weight = clf_weight.astype(jnp.bfloat16)
    y2 = jnp.asarray(y, jnp.int32).reshape(B, 1)
    yd2 = jnp.asarray(y_d, jnp.int32).reshape(B, 1)

    tile_c = _pick_tile_c(C, max_tile_c)
    n_tiles = C // tile_c

    # Explicit scoped-VMEM budget: resident emb (native + bf16 copy),
    # double-buffered bf16 W tiles, live f32 logits slab (+ temporaries),
    # small padded accumulators + packed output row.
    est = (B * D * emb.dtype.itemsize + B * D * 2
           + 2 * D * tile_c * 2
           + 4 * B * tile_c * 4
           + 6 * max(B, 8) * 128 * 4 + 128 * 4)
    vmem_limit = int(min(max(2 * est, 1 << 20), 32 << 20))

    kernel = functools.partial(_das_bl_kernel, margin=float(m), n_classes=C)
    out = pl.pallas_call(
        kernel,
        out_shape=jax.ShapeDtypeStruct((1, 128), jnp.float32),
        grid_spec=pltpu.PrefetchScalarGridSpec(
            num_scalar_prefetch=0,
            grid=(n_tiles,),
            in_specs=[
                pl.BlockSpec((B, D), lambda c: (0, 0)),        # emb (resident)
                pl.BlockSpec((D, tile_c), lambda c: (0, c)),   # W tiles (streamed)
                pl.BlockSpec((B, 1), lambda c: (0, 0)),        # y   (resident)
                pl.BlockSpec((B, 1), lambda c: (0, 0)),        # y_d (resident)
            ],
            out_specs=pl.BlockSpec((1, 128), lambda c: (0, 0)),
            scratch_shapes=[
                pltpu.VMEM((B, D), jnp.bfloat16),   # emb in MXU operand dtype
                pltpu.VMEM((B, 1), jnp.float32),    # running max
                pltpu.VMEM((B, 1), jnp.float32),    # running exp-sum
                pltpu.VMEM((B, 1), jnp.float32),    # running target logit
                pltpu.VMEM((B, 1), jnp.int32),      # running argmax
            ]),
        compiler_params=pltpu.CompilerParams(
            dimension_semantics=("arbitrary",),     # C is a reduction axis
            vmem_limit_bytes=vmem_limit),
    )(emb, clf_weight, y2, yd2)

    row = out[0]
    loss_c, acc, das_loss, das_dist = row[0], row[1], row[2], row[3]
    return ([loss_c, das_loss], [acc, das_dist])


if __name__ == "__main__":
    key = jax.random.PRNGKey(0)
    k_emb, k_w, k_y = jax.random.split(key, 3)

    B, D, C = 16, 128, 256       # batch, emb_size (nOut), n speaker classes
    emb = jax.random.normal(k_emb, (B, D), jnp.float32)
    y = jax.random.randint(k_y, (B,), 0, C, dtype=jnp.int32)
    # domain labels: first half domain 0 (main), second half domain 1 (target)
    y_d = jnp.concatenate(
        [jnp.zeros((B // 2,), jnp.int32), jnp.ones((B // 2,), jnp.int32)])

    # deterministic synthetic classifier-head weights, stored in bf16 (the
    # MXU-native operand dtype) so the kernel reads them without any cast.
    clf_weight = (jax.random.normal(k_w, (D, C), jnp.float32)
                  / jnp.sqrt(jnp.float32(D))).astype(jnp.bfloat16)

    # max_tile_c=128 -> a 2-step C grid at this small demo size, exercising the
    # streamed-W / online-LSE path end to end.
    fwd = jax.jit(functools.partial(das_bl_forward, m=2.0, max_tile_c=128))
    losses, stats = fwd(emb, y, y_d, clf_weight)
    jax.block_until_ready(losses)
    jax.block_until_ready(stats)
    # losses = [loss_c, DAS_loss], stats = [acc(%), DAS_dist_mean]
    print("KERNEL_OK")
</pallas_src>

<mosaic_0001>
module attributes {stable_mosaic.version = 11 : i64} {
  func.func @_das_bl_kernel(%arg0: i32, %arg1: memref<16x128xf32, #tpu.memory_space<vmem>>, %arg2: memref<128x128xbf16, #tpu.memory_space<vmem>>, %arg3: memref<16x1xi32, #tpu.memory_space<vmem>>, %arg4: memref<16x1xi32, #tpu.memory_space<vmem>>, %arg5: memref<1x128xf32, #tpu.memory_space<vmem>>, %arg6: memref<16x128xbf16, #tpu.memory_space<vmem>>, %arg7: memref<16x1xf32, #tpu.memory_space<vmem>>, %arg8: memref<16x1xf32, #tpu.memory_space<vmem>>, %arg9: memref<16x1xf32, #tpu.memory_space<vmem>>, %arg10: memref<16x1xi32, #tpu.memory_space<vmem>>) attributes {dimension_semantics = [#tpu.dimension_semantics<arbitrary>], iteration_bounds = array<i64: 2>, scalar_prefetch = 0 : i64, scratch_operands = 5 : i64, tpu.core_type = #tpu.core_type<tc>, window_params = [{pipeline_mode = #tpu.pipeline_mode<synchronous>, transform_indices = @transform_0, window_bounds = array<i64: 16, 128>}, {transform_indices = @transform_1, window_bounds = array<i64: 128, 128>}, {pipeline_mode = #tpu.pipeline_mode<synchronous>, transform_indices = @transform_2, window_bounds = array<i64: 16, 1>}, {pipeline_mode = #tpu.pipeline_mode<synchronous>, transform_indices = @transform_3, window_bounds = array<i64: 16, 1>}, {pipeline_mode = #tpu.pipeline_mode<synchronous>, transform_indices = @transform_4, window_bounds = array<i64: 1, 128>}]} {
    %c0 = arith.constant 0 : index
    %c0_0 = arith.constant 0 : index
    %0 = vector.load %arg3[%c0, %c0_0] : memref<16x1xi32, #tpu.memory_space<vmem>>, vector<16x1xi32>
    %1 = tpu.iota {dimensions = array<i32: 1>} : vector<1x128xi32>
    %c0_i32 = arith.constant 0 : i32
    %2 = arith.cmpi eq, %arg0, %c0_i32 : i32
    %3 = arith.extui %2 : i1 to i32
    %c0_i32_1 = arith.constant 0 : i32
    %4 = arith.cmpi ne, %3, %c0_i32_1 : i32
    scf.if %4 {
      %c0_28 = arith.constant 0 : index
      %c0_29 = arith.constant 0 : index
      %50 = vector.load %arg1[%c0_28, %c0_29] : memref<16x128xf32, #tpu.memory_space<vmem>>, vector<16x128xf32>
      %51 = arith.truncf %50 : vector<16x128xf32> to vector<16x128xbf16>
      %c0_30 = arith.constant 0 : index
      %c0_31 = arith.constant 0 : index
      %52 = vector.load %arg6[%c0_30, %c0_31] : memref<16x128xbf16, #tpu.memory_space<vmem>>, vector<16x128xbf16>
      tpu.vector_store %arg6[%c0_30, %c0_31], %51 {strides = array<i32>} : memref<16x128xbf16, #tpu.memory_space<vmem>>, vector<16x128xbf16>,
      %cst_32 = arith.constant 0xFF800000 : f32
      %53 = vector.broadcast %cst_32 : f32 to vector<16x1xf32>
      %c0_33 = arith.constant 0 : index
      %c0_34 = arith.constant 0 : index
      %54 = vector.load %arg7[%c0_33, %c0_34] : memref<16x1xf32, #tpu.memory_space<vmem>>, vector<16x1xf32>
      tpu.vector_store %arg7[%c0_33, %c0_34], %53 {strides = array<i32>} : memref<16x1xf32, #tpu.memory_space<vmem>>, vector<16x1xf32>,
      %cst_35 = arith.constant 0.000000e+00 : f32
      %55 = vector.broadcast %cst_35 : f32 to vector<16x1xf32>
      %c0_36 = arith.constant 0 : index
      %c0_37 = arith.constant 0 : index
      %56 = vector.load %arg8[%c0_36, %c0_37] : memref<16x1xf32, #tpu.memory_space<vmem>>, vector<16x1xf32>
      tpu.vector_store %arg8[%c0_36, %c0_37], %55 {strides = array<i32>} : memref<16x1xf32, #tpu.memory_space<vmem>>, vector<16x1xf32>,
      %cst_38 = arith.constant 0.000000e+00 : f32
      %57 = vector.broadcast %cst_38 : f32 to vector<16x1xf32>
      %c0_39 = arith.constant 0 : index
      %c0_40 = arith.constant 0 : index
      %58 = vector.load %arg9[%c0_39, %c0_40] : memref<16x1xf32, #tpu.memory_space<vmem>>, vector<16x1xf32>
      tpu.vector_store %arg9[%c0_39, %c0_40], %57 {strides = array<i32>} : memref<16x1xf32, #tpu.memory_space<vmem>>, vector<16x1xf32>,
      %c256_i32_41 = arith.constant 256 : i32
      %59 = vector.broadcast %c256_i32_41 : i32 to vector<16x1xi32>
      %c0_42 = arith.constant 0 : index
      %c0_43 = arith.constant 0 : index
      %60 = vector.load %arg10[%c0_42, %c0_43] : memref<16x1xi32, #tpu.memory_space<vmem>>, vector<16x1xi32>
      tpu.vector_store %arg10[%c0_42, %c0_43], %59 {strides = array<i32>} : memref<16x1xi32, #tpu.memory_space<vmem>>, vector<16x1xi32>,
      %61 = vector.extract_strided_slice %50 {offsets = [0, 0], sizes = [8, 128], strides = [1, 1]} : vector<16x128xf32> to vector<8x128xf32>
      %62 = vector.extract_strided_slice %50 {offsets = [8, 0], sizes = [8, 128], strides = [1, 1]} : vector<16x128xf32> to vector<8x128xf32>
      %c0_44 = arith.constant 0 : index
      %c0_45 = arith.constant 0 : index
      %63 = vector.load %arg4[%c0_44, %c0_45] : memref<16x1xi32, #tpu.memory_space<vmem>>, vector<8x1xi32>
      %c8 = arith.constant 8 : index
      %c0_46 = arith.constant 0 : index
      %64 = vector.load %arg4[%c8, %c0_46] : memref<16x1xi32, #tpu.memory_space<vmem>>, vector<8x1xi32>
      %c0_i32_47 = arith.constant 0 : i32
      %65 = vector.broadcast %c0_i32_47 : i32 to vector<8x1xi32>
      %66 = arith.cmpi eq, %63, %65 : vector<8x1xi32>
      %cst_48 = arith.constant 0.000000e+00 : f32
      %67 = vector.shape_cast %66 : vector<8x1xi1> to vector<8x1xi1>
      %68 = vector.broadcast %67 : vector<8x1xi1> to vector<8x128xi1>
      %69 = vector.broadcast %cst_48 : f32 to vector<8x128xf32>
      %70 = arith.select %68, %61, %69 : vector<8x128xi1>, vector<8x128xf32>
      %c0_i32_49 = arith.constant 0 : i32
      %71 = vector.broadcast %c0_i32_49 : i32 to vector<8x1xi32>
      %72 = arith.cmpi ne, %64, %71 : vector<8x1xi32>
      %c0_i32_50 = arith.constant 0 : i32
      %73 = vector.broadcast %c0_i32_50 : i32 to vector<8x1xi32>
      %74 = arith.cmpi ne, %63, %73 : vector<8x1xi32>
      %cst_51 = arith.constant 0.000000e+00 : f32
      %75 = vector.shape_cast %74 : vector<8x1xi1> to vector<8x1xi1>
      %76 = vector.broadcast %75 : vector<8x1xi1> to vector<8x128xi1>
      %77 = vector.broadcast %cst_51 : f32 to vector<8x128xf32>
      %78 = arith.select %76, %61, %77 : vector<8x128xi1>, vector<8x128xf32>
      %79 = vector.shape_cast %72 : vector<8x1xi1> to vector<8x1xi1>
      %80 = vector.broadcast %79 : vector<8x1xi1> to vector<8x128xi1>
      %81 = arith.select %80, %62, %78 : vector<8x128xi1>, vector<8x128xf32>
      %c7_i32 = arith.constant 7 : i32
      %82 = tpu.dynamic_rotate %70 by %c7_i32 dim 0 : vector<8x128xf32>, i32 -> vector<8x128xf32>
      %83 = arith.subf %70, %82 : vector<8x128xf32>
      %84 = arith.subf %70, %81 : vector<8x128xf32>
      %85 = arith.mulf %83, %83 : vector<8x128xf32>
      %cst_52 = arith.constant dense<0.000000e+00> : vector<8xf32>
      %86 = vector.multi_reduction <add>, %85, %cst_52 [1] : vector<8x128xf32> to vector<8xf32>
      %87 = vector.shape_cast %86 : vector<8xf32> to vector<8x1xf32>
      %88 = arith.mulf %84, %84 : vector<8x128xf32>
      %cst_53 = arith.constant dense<0.000000e+00> : vector<8xf32>
      %89 = vector.multi_reduction <add>, %88, %cst_53 [1] : vector<8x128xf32> to vector<8xf32>
      %90 = vector.shape_cast %89 : vector<8xf32> to vector<8x1xf32>
      %91 = math.sqrt %87 : vector<8x1xf32>
      %92 = math.sqrt %90 : vector<8x1xf32>
      %cst_54 = arith.constant 2.000000e+00 : f32
      %93 = vector.broadcast %cst_54 : f32 to vector<8x1xf32>
      %94 = arith.subf %93, %91 : vector<8x1xf32>
      %cst_55 = arith.constant 0.000000e+00 : f32
      %95 = vector.broadcast %cst_55 : f32 to vector<8x1xf32>
      %96 = arith.maximumf %94, %95 : vector<8x1xf32>
      %cst_56 = arith.constant 1.000000e+00 : f32
      %cst_57 = arith.constant 1.600000e+01 : f32
      %97 = arith.divf %cst_56, %cst_57 : f32
      %98 = arith.mulf %96, %96 : vector<8x1xf32>
      %99 = vector.shape_cast %98 : vector<8x1xf32> to vector<1x8x1xf32>
      %cst_58 = arith.constant dense<0.000000e+00> : vector<1xf32>
      %100 = vector.multi_reduction <add>, %99, %cst_58 [1, 2] : vector<1x8x1xf32> to vector<1xf32>
      %101 = vector.shape_cast %100 : vector<1xf32> to vector<1x1x1xf32>
      %102 = vector.extract %101[0, 0, 0] : f32 from vector<1x1x1xf32>
      %103 = vector.shape_cast %90 : vector<8x1xf32> to vector<1x8x1xf32>
      %cst_59 = arith.constant dense<0.000000e+00> : vector<1xf32>
      %104 = vector.multi_reduction <add>, %103, %cst_59 [1, 2] : vector<1x8x1xf32> to vector<1xf32>
      %105 = vector.shape_cast %104 : vector<1xf32> to vector<1x1x1xf32>
      %106 = vector.extract %105[0, 0, 0] : f32 from vector<1x1x1xf32>
      %107 = arith.addf %102, %106 : f32
      %108 = arith.mulf %107, %97 : f32
      %109 = vector.shape_cast %91 : vector<8x1xf32> to vector<1x8x1xf32>
      %cst_60 = arith.constant dense<0.000000e+00> : vector<1xf32>
      %110 = vector.multi_reduction <add>, %109, %cst_60 [1, 2] : vector<1x8x1xf32> to vector<1xf32>
      %111 = vector.shape_cast %110 : vector<1xf32> to vector<1x1x1xf32>
      %112 = vector.extract %111[0, 0, 0] : f32 from vector<1x1x1xf32>
      %113 = vector.shape_cast %92 : vector<8x1xf32> to vector<1x8x1xf32>
      %cst_61 = arith.constant dense<0.000000e+00> : vector<1xf32>
      %114 = vector.multi_reduction <add>, %113, %cst_61 [1, 2] : vector<1x8x1xf32> to vector<1xf32>
      %115 = vector.shape_cast %114 : vector<1xf32> to vector<1x1x1xf32>
      %116 = vector.extract %115[0, 0, 0] : f32 from vector<1x1x1xf32>
      %117 = arith.addf %112, %116 : f32
      %118 = arith.mulf %117, %97 : f32
      %c2_i32 = arith.constant 2 : i32
      %119 = vector.broadcast %c2_i32 : i32 to vector<1x128xi32>
      %120 = arith.cmpi eq, %1, %119 : vector<1x128xi32>
      %cst_62 = arith.constant 0.000000e+00 : f32
      %121 = vector.broadcast %108 : f32 to vector<1x128xf32>
      %122 = vector.broadcast %cst_62 : f32 to vector<1x128xf32>
      %123 = arith.select %120, %121, %122 : vector<1x128xi1>, vector<1x128xf32>
      %c3_i32 = arith.constant 3 : i32
      %124 = vector.broadcast %c3_i32 : i32 to vector<1x128xi32>
      %125 = arith.cmpi eq, %1, %124 : vector<1x128xi32>
      %cst_63 = arith.constant 0.000000e+00 : f32
      %126 = vector.broadcast %118 : f32 to vector<1x128xf32>
      %127 = vector.broadcast %cst_63 : f32 to vector<1x128xf32>
      %128 = arith.select %125, %126, %127 : vector<1x128xi1>, vector<1x128xf32>
      %129 = arith.addf %123, %128 : vector<1x128xf32>
      %c0_64 = arith.constant 0 : index
      %c0_65 = arith.constant 0 : index
      %130 = vector.load %arg5[%c0_64, %c0_65] : memref<1x128xf32, #tpu.memory_space<vmem>>, vector<1x128xf32>
      tpu.vector_store %arg5[%c0_64, %c0_65], %129 {strides = array<i32>} : memref<1x128xf32, #tpu.memory_space<vmem>>, vector<1x128xf32>,
    } else {
    }
    %c0_2 = arith.constant 0 : index
    %c0_3 = arith.constant 0 : index
    %5 = vector.load %arg6[%c0_2, %c0_3] : memref<16x128xbf16, #tpu.memory_space<vmem>>, vector<16x128xbf16>
    %c0_4 = arith.constant 0 : index
    %c0_5 = arith.constant 0 : index
    %6 = vector.load %arg2[%c0_4, %c0_5] : memref<128x128xbf16, #tpu.memory_space<vmem>>, vector<128x128xbf16>
    %cst = arith.constant dense<0.000000e+00> : vector<16x128xf32>
    %7 = tpu.matmul %5, %6, %cst {dimension_numbers = #tpu.dot_dimension_numbers<[1], [0], [0], [1], [0, 0, 1, 1], [], []>} : vector<16x128xbf16>, vector<128x128xbf16>, vector<16x128xf32> -> vector<16x128xf32>
    %8 = tpu.iota {dimensions = array<i32: 1>} : vector<16x128xi32>
    %c128_i32 = arith.constant 128 : i32
    %9 = arith.muli %arg0, %c128_i32 : i32
    %10 = vector.broadcast %9 : i32 to vector<16x128xi32>
    %11 = arith.addi %8, %10 : vector<16x128xi32>
    %c0_6 = arith.constant 0 : index
    %c0_7 = arith.constant 0 : index
    %12 = vector.load %arg7[%c0_6, %c0_7] : memref<16x1xf32, #tpu.memory_space<vmem>>, vector<16x1xf32>
    %cst_8 = arith.constant dense<0xFF800000> : vector<16xf32>
    %13 = vector.multi_reduction <maximumf>, %7, %cst_8 [1] : vector<16x128xf32> to vector<16xf32>
    %14 = vector.shape_cast %13 : vector<16xf32> to vector<16x1xf32>
    %15 = vector.broadcast %14 : vector<16x1xf32> to vector<16x128xf32>
    %16 = arith.cmpf oge, %7, %15 : vector<16x128xf32>
    %c256_i32 = arith.constant 256 : i32
    %17 = vector.broadcast %c256_i32 : i32 to vector<16x128xi32>
    %18 = arith.select %16, %11, %17 : vector<16x128xi1>, vector<16x128xi32>
    %cst_9 = arith.constant dense<2147483647> : vector<16xi32>
    %19 = vector.multi_reduction <minsi>, %18, %cst_9 [1] : vector<16x128xi32> to vector<16xi32>
    %20 = vector.shape_cast %19 : vector<16xi32> to vector<16x1xi32>
    %21 = arith.cmpf ogt, %14, %12 : vector<16x1xf32>
    %c0_10 = arith.constant 0 : index
    %c0_11 = arith.constant 0 : index
    %22 = vector.load %arg10[%c0_10, %c0_11] : memref<16x1xi32, #tpu.memory_space<vmem>>, vector<16x1xi32>
    %23 = arith.select %21, %20, %22 : vector<16x1xi1>, vector<16x1xi32>
    %c0_12 = arith.constant 0 : index
    %c0_13 = arith.constant 0 : index
    %24 = vector.load %arg10[%c0_12, %c0_13] : memref<16x1xi32, #tpu.memory_space<vmem>>, vector<16x1xi32>
    tpu.vector_store %arg10[%c0_12, %c0_13], %23 {strides = array<i32>} : memref<16x1xi32, #tpu.memory_space<vmem>>, vector<16x1xi32>,
    %25 = arith.maximumf %12, %14 : vector<16x1xf32>
    %c0_14 = arith.constant 0 : index
    %c0_15 = arith.constant 0 : index
    %26 = vector.load %arg8[%c0_14, %c0_15] : memref<16x1xf32, #tpu.memory_space<vmem>>, vector<16x1xf32>
    %27 = arith.subf %12, %25 : vector<16x1xf32>
    %28 = math.exp %27 : vector<16x1xf32>
    %29 = arith.mulf %26, %28 : vector<16x1xf32>
    %30 = vector.broadcast %25 : vector<16x1xf32> to vector<16x128xf32>
    %31 = arith.subf %7, %30 : vector<16x128xf32>
    %32 = math.exp %31 : vector<16x128xf32>
    %cst_16 = arith.constant dense<0.000000e+00> : vector<16xf32>
    %33 = vector.multi_reduction <add>, %32, %cst_16 [1] : vector<16x128xf32> to vector<16xf32>
    %34 = vector.shape_cast %33 : vector<16xf32> to vector<16x1xf32>
    %35 = arith.addf %29, %34 : vector<16x1xf32>
    %c0_17 = arith.constant 0 : index
    %c0_18 = arith.constant 0 : index
    %36 = vector.load %arg8[%c0_17, %c0_18] : memref<16x1xf32, #tpu.memory_space<vmem>>, vector<16x1xf32>
    tpu.vector_store %arg8[%c0_17, %c0_18], %35 {strides = array<i32>} : memref<16x1xf32, #tpu.memory_space<vmem>>, vector<16x1xf32>,
    %c0_19 = arith.constant 0 : index
    %c0_20 = arith.constant 0 : index
    %37 = vector.load %arg7[%c0_19, %c0_20] : memref<16x1xf32, #tpu.memory_space<vmem>>, vector<16x1xf32>
    tpu.vector_store %arg7[%c0_19, %c0_20], %25 {strides = array<i32>} : memref<16x1xf32, #tpu.memory_space<vmem>>, vector<16x1xf32>,
    %c0_21 = arith.constant 0 : index
    %c0_22 = arith.constant 0 : index
    %38 = vector.load %arg9[%c0_21, %c0_22] : memref<16x1xf32, #tpu.memory_space<vmem>>, vector<16x1xf32>
    %39 = vector.broadcast %0 : vector<16x1xi32> to vector<16x128xi32>
    %40 = arith.cmpi eq, %11, %39 : vector<16x128xi32>
    %cst_23 = arith.constant 0.000000e+00 : f32
    %41 = vector.broadcast %cst_23 : f32 to vector<16x128xf32>
    %42 = arith.select %40, %7, %41 : vector<16x128xi1>, vector<16x128xf32>
    %cst_24 = arith.constant dense<0.000000e+00> : vector<16xf32>
    %43 = vector.multi_reduction <add>, %42, %cst_24 [1] : vector<16x128xf32> to vector<16xf32>
    %44 = vector.shape_cast %43 : vector<16xf32> to vector<16x1xf32>
    %45 = arith.addf %38, %44 : vector<16x1xf32>
    %c0_25 = arith.constant 0 : index
    %c0_26 = arith.constant 0 : index
    %46 = vector.load %arg9[%c0_25, %c0_26] : memref<16x1xf32, #tpu.memory_space<vmem>>, vector<16x1xf32>
    tpu.vector_store %arg9[%c0_25, %c0_26], %45 {strides = array<i32>} : memref<16x1xf32, #tpu.memory_space<vmem>>, vector<16x1xf32>,
    %c1_i32 = arith.constant 1 : i32
    %47 = arith.cmpi eq, %arg0, %c1_i32 : i32
    %48 = arith.extui %47 : i1 to i32
    %c0_i32_27 = arith.constant 0 : i32
    %49 = arith.cmpi ne, %48, %c0_i32_27 : i32
    scf.if %49 {
      %c0_28 = arith.constant 0 : index
      %c0_29 = arith.constant 0 : index
      %50 = vector.load %arg8[%c0_28, %c0_29] : memref<16x1xf32, #tpu.memory_space<vmem>>, vector<16x1xf32>
      %51 = math.log %50 : vector<16x1xf32>
      %c0_30 = arith.constant 0 : index
      %c0_31 = arith.constant 0 : index
      %52 = vector.load %arg7[%c0_30, %c0_31] : memref<16x1xf32, #tpu.memory_space<vmem>>, vector<16x1xf32>
      %53 = arith.addf %51, %52 : vector<16x1xf32>
      %c0_32 = arith.constant 0 : index
      %c0_33 = arith.constant 0 : index
      %54 = vector.load %arg9[%c0_32, %c0_33] : memref<16x1xf32, #tpu.memory_space<vmem>>, vector<16x1xf32>
      %55 = arith.subf %53, %54 : vector<16x1xf32>
      %56 = vector.shape_cast %55 : vector<16x1xf32> to vector<1x16x1xf32>
      %cst_34 = arith.constant dense<0.000000e+00> : vector<1xf32>
      %57 = vector.multi_reduction <add>, %56, %cst_34 [1, 2] : vector<1x16x1xf32> to vector<1xf32>
      %58 = vector.shape_cast %57 : vector<1xf32> to vector<1x1x1xf32>
      %59 = vector.extract %58[0, 0, 0] : f32 from vector<1x1x1xf32>
      %cst_35 = arith.constant 1.600000e+01 : f32
      %60 = arith.divf %59, %cst_35 : f32
      %c0_36 = arith.constant 0 : index
      %c0_37 = arith.constant 0 : index
      %61 = vector.load %arg10[%c0_36, %c0_37] : memref<16x1xi32, #tpu.memory_space<vmem>>, vector<16x1xi32>
      %62 = arith.cmpi eq, %61, %0 : vector<16x1xi32>
      %63 = arith.extui %62 : vector<16x1xi1> to vector<16x1xi32>
      %64 = arith.sitofp %63 : vector<16x1xi32> to vector<16x1xf32>
      %65 = vector.shape_cast %64 : vector<16x1xf32> to vector<1x16x1xf32>
      %cst_38 = arith.constant dense<0.000000e+00> : vector<1xf32>
      %66 = vector.multi_reduction <add>, %65, %cst_38 [1, 2] : vector<1x16x1xf32> to vector<1xf32>
      %67 = vector.shape_cast %66 : vector<1xf32> to vector<1x1x1xf32>
      %68 = vector.extract %67[0, 0, 0] : f32 from vector<1x1x1xf32>
      %cst_39 = arith.constant 1.600000e+01 : f32
      %69 = arith.divf %68, %cst_39 : f32
      %cst_40 = arith.constant 1.000000e+02 : f32
      %70 = arith.mulf %69, %cst_40 : f32
      %c0_41 = arith.constant 0 : index
      %c0_42 = arith.constant 0 : index
      %71 = vector.load %arg5[%c0_41, %c0_42] : memref<1x128xf32, #tpu.memory_space<vmem>>, vector<1x128xf32>
      %c0_i32_43 = arith.constant 0 : i32
      %72 = vector.broadcast %c0_i32_43 : i32 to vector<1x128xi32>
      %73 = arith.cmpi eq, %1, %72 : vector<1x128xi32>
      %cst_44 = arith.constant 0.000000e+00 : f32
      %74 = vector.broadcast %60 : f32 to vector<1x128xf32>
      %75 = vector.broadcast %cst_44 : f32 to vector<1x128xf32>
      %76 = arith.select %73, %74, %75 : vector<1x128xi1>, vector<1x128xf32>
      %77 = arith.addf %71, %76 : vector<1x128xf32>
      %c1_i32_45 = arith.constant 1 : i32
      %78 = vector.broadcast %c1_i32_45 : i32 to vector<1x128xi32>
      %79 = arith.cmpi eq, %1, %78 : vector<1x128xi32>
      %cst_46 = arith.constant 0.000000e+00 : f32
      %80 = vector.broadcast %70 : f32 to vector<1x128xf32>
      %81 = vector.broadcast %cst_46 : f32 to vector<1x128xf32>
      %82 = arith.select %79, %80, %81 : vector<1x128xi1>, vector<1x128xf32>
      %83 = arith.addf %77, %82 : vector<1x128xf32>
      %c0_47 = arith.constant 0 : index
      %c0_48 = arith.constant 0 : index
      %84 = vector.load %arg5[%c0_47, %c0_48] : memref<1x128xf32, #tpu.memory_space<vmem>>, vector<1x128xf32>
      tpu.vector_store %arg5[%c0_47, %c0_48], %83 {strides = array<i32>} : memref<1x128xf32, #tpu.memory_space<vmem>>, vector<1x128xf32>,
    } else {
    }
    return
  }
  func.func @transform_0(%arg0: i32) -> (i32, i32) {
    %c0_i32 = arith.constant 0 : i32
    %c0_i32_0 = arith.constant 0 : i32
    %c0_i32_1 = arith.constant 0 : i32
    return %c0_i32, %c0_i32_0 : i32, i32
  }
  func.func @transform_1(%arg0: i32) -> (i32, i32) {
    %c0_i32 = arith.constant 0 : i32
    %c0_i32_0 = arith.constant 0 : i32
    return %c0_i32, %arg0 : i32, i32
  }
  func.func @transform_2(%arg0: i32) -> (i32, i32) {
    %c0_i32 = arith.constant 0 : i32
    %c0_i32_0 = arith.constant 0 : i32
    %c0_i32_1 = arith.constant 0 : i32
    return %c0_i32, %c0_i32_0 : i32, i32
  }
  func.func @transform_3(%arg0: i32) -> (i32, i32) {
    %c0_i32 = arith.constant 0 : i32
    %c0_i32_0 = arith.constant 0 : i32
    %c0_i32_1 = arith.constant 0 : i32
    return %c0_i32, %c0_i32_0 : i32, i32
  }
  func.func @transform_4(%arg0: i32) -> (i32, i32) {
    %c0_i32 = arith.constant 0 : i32
    %c0_i32_0 = arith.constant 0 : i32
    %c0_i32_1 = arith.constant 0 : i32
    return %c0_i32, %c0_i32_0 : i32, i32
  }
}

</mosaic_0001>

<llo_original>
// kernel: das_bl_forward.1
$region0: #{das_bl_forward.1}
  #allocation0 [shape = 'u32[]', space=smem, size = 0x4, offset = 0x4, fixed_abs, tag = 'smem constant byte address 0x4 - core index']
  #allocation1 [shape = 'u32[72,128]{1,0:T(1,128)}', space=vmem, size = 0x9000, scoped, tag = 'internal scratch']
  #allocation2 [shape = 'bf16[16,128]{1,0:T(8,128)(2,1)}', space=vmem, size = 0x1000, scoped, tag = 'scratch operand']
  #allocation3 [shape = 'f32[16,1]{1,0:T(8,128)}', space=vmem, size = 0x2000, scoped, tag = 'scratch operand']
  #allocation4 [shape = 'f32[16,1]{1,0:T(8,128)}', space=vmem, size = 0x2000, scoped, tag = 'scratch operand']
  #allocation5 [shape = 'f32[16,1]{1,0:T(8,128)}', space=vmem, size = 0x2000, scoped, tag = 'scratch operand']
  #allocation6 [shape = 's32[16,1]{1,0:T(8,128)}', space=vmem, size = 0x2000, scoped, tag = 'scratch operand']
  %s0 = inlined_call_operand.vmem [shape: f32[16,128], index: 0, kind: input, shape index: {}]
  %s1 = inlined_call_operand.hbm [shape: bf16[128,256], index: 1, kind: input, shape index: {}]
  %s2 = inlined_call_operand.vmem [shape: s32[16,1], index: 2, kind: input, shape index: {}]
  %s3 = inlined_call_operand.vmem [shape: s32[16,1], index: 3, kind: input, shape index: {}]
  %s4 = inlined_call_operand.vmem [shape: f32[1,128], index: 4, kind: output, shape index: {}]
  %s5 = sld [smem:[#allocation0]]
  $region61: #{das_bl_forward.1} parent=0
    _
  %s7 = ssub.s32 1, %s5
  %s8 = scalar_select 0, %s7, %s5
  $region1: #{das_bl_forward.1} parent=0
    #allocation7 [shape = 'u8[65536]{0}', space=vmem, size = 0x10000, scoped, tag = 'input window, operand 1']
    #allocation8 [shape = 's32[2]{0}', space=sflag, size = 0x8, scoped, tag = 'scoped memory for das_bl_forward.1']
    %9 = vsyncpa [#allocation8], 0
    %s10 = scalar_lea.sflag [#allocation8], 1
    %11 = vsyncpa %s10, 0
    loop: start=0, step=1, limit=4
    $region2: #{das_bl_forward.1} parent=1 // loop_pre_header
      _
    $region3: #{das_bl_forward.1} parent=1 // loop_header
      %s13 = sphi 0, %s17
      %p14 = scmp.ge.s32.totalorder %s13, 4
      %s21 = sphi 0, %s21
      %s23 = sphi 0, %s21
      %s24 = sphi 0, %s23
      %s38 = sphi 0, %s24
      %s44 = sphi 0, %s46
      %s47 = sphi 0, %s44
      %s48 = sphi 0, %s47
      %s64 = sphi 0, %s48
      %s68 = sphi 0, %s68
      %s70 = sphi 0, %s68
      %s71 = sphi 0, %s70
      %s85 = sphi 0, %s71
      %s89 = sphi 0, %s89
      %s91 = sphi 0, %s89
      %s92 = sphi 0, %s91
      %s106 = sphi 0, %s92
      %s110 = sphi 0, %s110
      %s112 = sphi 0, %s110
      %s113 = sphi 0, %s112
      %s127 = sphi 0, %s113
    $region4: #{das_bl_forward.1} parent=1 // loop_header_branch
      %16 = sbr.rel (%p14) target = $region8
    $region5: #{das_bl_forward.1} parent=1 // loop_body
      %s18 = ssub.s32 %s13, 1
      %s19 = ssub.s32 %s13, 2
      %s20 = sadd.s32 %s13, 1
      %s22 = sadd.s32 %s21, 1
      %p25 = scmp.eq.s32.totalorder %s13, 1
      %p26 = scmp.ne.s32.totalorder %s21, %s23
      %p27 = scmp.eq.s32.totalorder %s13, 0
      %p28 = por %p26, %p27
      %p29 = scmp.ne.s32.totalorder %s21, %s23
      %p30 = scmp.eq.s32.totalorder %s18, 1
      %p31 = por %p29, %p30
      %p32 = scmp.ne.s32.totalorder %s23, %s24
      %p33 = scmp.eq.s32.totalorder %s18, 0
      %p34 = por %p32, %p33
      %p35 = scmp.ne.s32.totalorder %s23, %s24
      %p36 = scmp.eq.s32.totalorder %s19, 1
      %p37 = por %p35, %p36
      %p39 = scmp.ne.s32.totalorder %s24, %s38
      %p40 = scmp.eq.s32.totalorder %s19, 0
      %p41 = por %p39, %p40
      %s42 = ssub.s32 %s13, %s20
      %p43 = scmp.eq.s32.totalorder %s42, 0
      %s45 = sadd.s32 %s44, 1
      %s46 = scalar_select %p43, %s44, %s45
      %p49 = pneg %p43
      %p50 = scmp.eq.s32.totalorder %s13, 1
      %p51 = por %p49, %p50
      %p52 = scmp.ne.s32.totalorder %s44, %s47
      %p53 = scmp.eq.s32.totalorder %s13, 0
      %p54 = por %p52, %p53
      %p55 = scmp.ne.s32.totalorder %s44, %s47
      %p56 = scmp.eq.s32.totalorder %s18, 1
      %p57 = por %p55, %p56
      %p58 = scmp.ne.s32.totalorder %s47, %s48
      %p59 = scmp.eq.s32.totalorder %s18, 0
      %p60 = por %p58, %p59
      %p61 = scmp.ne.s32.totalorder %s47, %s48
      %p62 = scmp.eq.s32.totalorder %s19, 1
      %p63 = por %p61, %p62
      %p65 = scmp.ne.s32.totalorder %s48, %s64
      %p66 = scmp.eq.s32.totalorder %s19, 0
      %p67 = por %p65, %p66
      %s69 = sadd.s32 %s68, 1
      %p72 = scmp.eq.s32.totalorder %s13, 1
      %p73 = scmp.ne.s32.totalorder %s68, %s70
      %p74 = scmp.eq.s32.totalorder %s13, 0
      %p75 = por %p73, %p74
      %p76 = scmp.ne.s32.totalorder %s68, %s70
      %p77 = scmp.eq.s32.totalorder %s18, 1
      %p78 = por %p76, %p77
      %p79 = scmp.ne.s32.totalorder %s70, %s71
      %p80 = scmp.eq.s32.totalorder %s18, 0
      %p81 = por %p79, %p80
      %p82 = scmp.ne.s32.totalorder %s70, %s71
      %p83 = scmp.eq.s32.totalorder %s19, 1
      %p84 = por %p82, %p83
      %p86 = scmp.ne.s32.totalorder %s71, %s85
      %p87 = scmp.eq.s32.totalorder %s19, 0
      %p88 = por %p86, %p87
      %s90 = sadd.s32 %s89, 1
      %p93 = scmp.eq.s32.totalorder %s13, 1
      %p94 = scmp.ne.s32.totalorder %s89, %s91
      %p95 = scmp.eq.s32.totalorder %s13, 0
      %p96 = por %p94, %p95
      %p97 = scmp.ne.s32.totalorder %s89, %s91
      %p98 = scmp.eq.s32.totalorder %s18, 1
      %p99 = por %p97, %p98
      %p100 = scmp.ne.s32.totalorder %s91, %s92
      %p101 = scmp.eq.s32.totalorder %s18, 0
      %p102 = por %p100, %p101
      %p103 = scmp.ne.s32.totalorder %s91, %s92
      %p104 = scmp.eq.s32.totalorder %s19, 1
      %p105 = por %p103, %p104
      %p107 = scmp.ne.s32.totalorder %s92, %s106
      %p108 = scmp.eq.s32.totalorder %s19, 0
      %p109 = por %p107, %p108
      %s111 = sadd.s32 %s110, 1
      %p114 = scmp.eq.s32.totalorder %s13, 1
      %p115 = scmp.ne.s32.totalorder %s110, %s112
      %p116 = scmp.eq.s32.totalorder %s13, 0
      %p117 = por %p115, %p116
      %p118 = scmp.ne.s32.totalorder %s110, %s112
      %p119 = scmp.eq.s32.totalorder %s18, 1
      %p120 = por %p118, %p119
      %p121 = scmp.ne.s32.totalorder %s112, %s113
      %p122 = scmp.eq.s32.totalorder %s18, 0
      %p123 = por %p121, %p122
      %p124 = scmp.ne.s32.totalorder %s112, %s113
      %p125 = scmp.eq.s32.totalorder %s19, 1
      %p126 = por %p124, %p125
      %p128 = scmp.ne.s32.totalorder %s113, %s127
      %p129 = scmp.eq.s32.totalorder %s19, 0
      %p130 = por %p128, %p129
      %p131 = scmp.le.s32.totalorder 1, %s13
      %p132 = scmp.lt.s32.totalorder %s13, 3
      %p133 = pnand %p131, %p132
      %p134 = pneg %p133
      // Predicated region
      $region9: #{das_bl_forward.1} parent=5 // pred_check
        _
      $region10: #{das_bl_forward.1} parent=5 // pred_check_branch
        %136 = sbr.rel (%p133) target = $region12
      $region11: #{das_bl_forward.1} parent=5 // pred_region
        %s137 = ssub.s32 %s13, 1
        // Predicated region
        $region13: #{das_bl_forward.1} parent=11 // pred_check
          %p138 = pneg %p34
        $region14: #{das_bl_forward.1} parent=11 // pred_check_branch
          %140 = sbr.rel (%p138) target = $region16
        $region15: #{das_bl_forward.1} parent=11 // pred_region
          _
        $region16: #{das_bl_forward.1} parent=11 // pred_fallthru
          _
        // Predicated region
        $region17: #{das_bl_forward.1} parent=11 // pred_check
          %p141 = pneg %p81
        $region18: #{das_bl_forward.1} parent=11 // pred_check_branch
          %143 = sbr.rel (%p141) target = $region20
        $region19: #{das_bl_forward.1} parent=11 // pred_region
          _
        $region20: #{das_bl_forward.1} parent=11 // pred_fallthru
          _
        // Predicated region
        $region21: #{das_bl_forward.1} parent=11 // pred_check
          %p144 = pneg %p102
        $region22: #{das_bl_forward.1} parent=11 // pred_check_branch
          %146 = sbr.rel (%p144) target = $region24
        $region23: #{das_bl_forward.1} parent=11 // pred_region
          _
        $region24: #{das_bl_forward.1} parent=11 // pred_fallthru
          _
      $region12: #{das_bl_forward.1} parent=5 // pred_fallthru
        _
      %p147 = scmp.lt.s32.totalorder %s13, 2
      // Predicated region
      $region25: #{das_bl_forward.1} parent=5 // pred_check
        %p148 = pneg %p147
      $region26: #{das_bl_forward.1} parent=5 // pred_check_branch
        %150 = sbr.rel (%p148) target = $region28
      $region27: #{das_bl_forward.1} parent=5 // pred_region
        // Predicated region
        $region29: #{das_bl_forward.1} parent=27 // pred_check
          %p151 = pneg %p54
        $region30: #{das_bl_forward.1} parent=27 // pred_check_branch
          %153 = sbr.rel (%p151) target = $region32
        $region31: #{das_bl_forward.1} parent=27 // pred_region
          %s154 = sand.u32 %s44, 1
          %s155 = scalar_lea.sflag [#allocation8], %s154
          %s156 = sand.u32 %s44, 1
          %s157 = smul.addr %s156, 64
          %s158 = scalar_lea.vmem [#allocation7], %s157
          %160 = vsyncadd %s155, 0
          %s161 = smul.addr %s13, 4
          %s162 = scalar_lea.hbm %s1, %s161
          %s163 = sshll.u32 %s162, 4
          %s164 = int_to_ptr.hbm [resolvable:$true] %s163
          %s165 = sshll.u32 %s158, 4
          %s166 = int_to_ptr.vmem [resolvable:$true] %s165
          %171 = dma.hbm_to_vmem [thread:$0]  %s164, 1024, %s166, %s155, 128, 64, 4
        $region32: #{das_bl_forward.1} parent=27 // pred_fallthru
          _
      $region28: #{das_bl_forward.1} parent=5 // pred_fallthru
        _
      %p172 = scmp.le.s32.totalorder 1, %s13
      %p173 = scmp.lt.s32.totalorder %s13, 3
      %p174 = pnand %p172, %p173
      %p175 = pneg %p174
      // Predicated region
      $region33: #{das_bl_forward.1} parent=5 // pred_check
        _
      $region34: #{das_bl_forward.1} parent=5 // pred_check_branch
        %177 = sbr.rel (%p174) target = $region36
      $region35: #{das_bl_forward.1} parent=5 // pred_region
        %s178 = ssub.s32 %s13, 1
        %s179 = sand.u32 %s47, 1
        %s180 = scalar_lea.sflag [#allocation8], %s179
        %s181 = sand.u32 %s47, 1
        %s182 = smul.addr %s181, 64
        %s183 = scalar_lea.vmem [#allocation7], %s182
        // Predicated region
        $region37: #{das_bl_forward.1} parent=35 // pred_check
          %p184 = pneg %p60
        $region38: #{das_bl_forward.1} parent=35 // pred_check_branch
          %186 = sbr.rel (%p184) target = $region40
        $region39: #{das_bl_forward.1} parent=35 // pred_region
          %188 = dma.done %s180, 1024
        $region40: #{das_bl_forward.1} parent=35 // pred_fallthru
          _
        %p189 = pneg %p34
        %p190 = pneg %p31
        %s191 = sand.u32 %s47, 1
        %s192 = scalar_lea.sflag [#allocation8], %s191
        %s193 = sand.u32 %s47, 1
        %s194 = smul.addr %s193, 64
        %s195 = scalar_lea.vmem [#allocation7], %s194
        %p196 = pneg %p60
        %p197 = pneg %p57
        %p198 = pneg %p81
        %p199 = pneg %p78
        %p200 = pneg %p102
        %p201 = pneg %p99
        %p202 = pneg %p123
        %p203 = pneg %p120
        %v204 = vld [vmem:[%s2] sm:$0xff]
        %v205 = vld [vmem:[%s2 + $0x8] sm:$0xff]
        %v206 = vlaneseq
        %v207 = vand.u32 %v206, 127
        %p208 = scmp.eq.s32.totalorder %s18, 0
        // Predicated region
        $region41: #{das_bl_forward.1} parent=35 // pred_check
          %p209 = pneg %p208
        $region42: #{das_bl_forward.1} parent=35 // pred_check_branch
          %211 = sbr.rel (%p209) target = $region44
        $region43: #{das_bl_forward.1} parent=35 // pred_region
          %v212 = vld [vmem:[%s0] sm:$0xff]
          %v213 = vld [vmem:[%s0 + $0x8] sm:$0xff]
          %v214 = vpack.c.bf16 %v212, %v212
          %v215 = vpack.c.bf16 %v213, %v213
          %216 = vst [vmem:[#allocation2] sm:$0xf] %v214
          %217 = vst [vmem:[#allocation2 + $0x4] sm:$0xf] %v215
          %vm218 = vcmask 7168
          %219 = vst.msk [vmem:[#allocation3] sm:$0xff] %vm218, -inf
          %220 = vst.msk [vmem:[#allocation3 + $0x8] sm:$0xff] %vm218, -inf
          %221 = vst.msk [vmem:[#allocation4] sm:$0xff] %vm218, 0.0
          %222 = vst.msk [vmem:[#allocation4 + $0x8] sm:$0xff] %vm218, 0.0
          %223 = vst.msk [vmem:[#allocation5] sm:$0xff] %vm218, 0.0
          %224 = vst.msk [vmem:[#allocation5 + $0x8] sm:$0xff] %vm218, 0.0
          %225 = vst.msk [vmem:[#allocation6] sm:$0xff] %vm218, 256
          %226 = vst.msk [vmem:[#allocation6 + $0x8] sm:$0xff] %vm218, 256
          %v227 = vld [vmem:[%s3] sm:$0xff]
          %v228 = vld [vmem:[%s3 + $0x8] sm:$0xff]
          %vm229 = vcmp.eq.s32.totalorder %v227, 0
          %v230 = vsel %vm229, 1, 0
          %231 = vset.pattern.permute.xlu0 0
          %232 = vperm.xlu0 %231, %v230
          %v233 = vpop.permute.xlu0 %232
          %vm234 = vcmp.eq.s32.totalorder %v233, 1
          %v235 = vsel %vm234, %v212, 0.0
          %vm236 = vcmp.ne.s32.totalorder %v228, 0
          %vm237 = vcmp.ne.s32.totalorder %v227, 0
          %v238 = vsel %vm237, 1, 0
          %239 = vset.pattern.permute.xlu0 0
          %240 = vperm.xlu0 %239, %v238
          %v241 = vpop.permute.xlu0 %240
          %vm242 = vcmp.eq.s32.totalorder %v241, 1
          %v243 = vsel %vm242, %v212, 0.0
          %v244 = vsel %vm236, 1, 0
          %245 = vset.pattern.permute.xlu0 0
          %246 = vperm.xlu0 %245, %v244
          %v247 = vpop.permute.xlu0 %246
          %vm248 = vcmp.eq.s32.totalorder %v247, 1
          %v249 = vsel %vm248, %v213, %v243
          %v250 = vrot.slane %v235, 1
          %v251 = vsub.f32 %v235, %v250
          %v252 = vsub.f32 %v235, %v249
          %v253 = vmul.f32 %v251, %v251
          %254 = vadd.xlane.f32.xlu0 %v253
          %v255 = vpop.xlane.xlu0 %254
          %v256 = vmul.f32 %v252, %v252
          %257 = vadd.xlane.f32.xlu0 %v256
          %v258 = vpop.xlane.xlu0 %257
          %v259 = vrsqrt.pop %v255
          %v260 = vmul.f32 %v259, %v255
          %v261 = vmul.f32 %v260, %v259
          %v262 = vmul.f32 0.5, %v261
          %v263 = vsub.f32 1.5, %v262
          %v264 = vmul.f32 %v259, %v263
          %v265 = vmul.f32 %v255, %v264
          %vm266 = vcmp.eq.f32.partialorder %v255, inf
          %v267 = vsel %vm266, %v255, %v265
          %vm268 = vcmp.eq.f32.partialorder %v255, 0.0
          %v269 = vand.u32 %v255, 2147483648
          %v270 = vsel %vm268, %v269, %v267
          %v271 = vrsqrt.pop %v258
          %v272 = vmul.f32 %v271, %v258
          %v273 = vmul.f32 %v272, %v271
          %v274 = vmul.f32 0.5, %v273
          %v275 = vsub.f32 1.5, %v274
          %v276 = vmul.f32 %v271, %v275
          %v277 = vmul.f32 %v258, %v276
          %vm278 = vcmp.eq.f32.partialorder %v258, inf
          %v279 = vsel %vm278, %v258, %v277
          %vm280 = vcmp.eq.f32.partialorder %v258, 0.0
          %v281 = vand.u32 %v258, 2147483648
          %v282 = vsel %vm280, %v281, %v279
          %v283 = vsub.f32 2.0, %v270
          %v284 = vmax.f32 %v283, 0.0
          %v285 = vmul.f32 %v284, %v284
          %v286 = vsel %vm218, %v285, 0.0
          %287 = vadd.xlane.f32.xlu0 %v286
          %v288 = vpop.xlane.xlu0 %287
          %v289 = vrot.slane %v288, 4
          %v290 = vadd.f32 %v288, %v289
          %v291 = vrot.slane %v290, 2
          %v292 = vadd.f32 %v290, %v291
          %v293 = vrot.slane %v292, 1
          %v294 = vadd.f32 %v292, %v293
          %s295 = vtos %v294
          %v296 = vsel %vm218, %v258, 0.0
          %297 = vadd.xlane.f32.xlu0 %v296
          %v298 = vpop.xlane.xlu0 %297
          %v299 = vrot.slane %v298, 4
          %v300 = vadd.f32 %v298, %v299
          %v301 = vrot.slane %v300, 2
          %v302 = vadd.f32 %v300, %v301
          %v303 = vrot.slane %v302, 1
          %v304 = vadd.f32 %v302, %v303
          %s305 = vtos %v304
          %s306 = sadd.f32 %s295, %s305
          %s307 = smul.f32 %s306, 0.0625
          %v308 = vsel %vm218, %v270, 0.0
          %309 = vadd.xlane.f32.xlu0 %v308
          %v310 = vpop.xlane.xlu0 %309
          %v311 = vrot.slane %v310, 4
          %v312 = vadd.f32 %v310, %v311
          %v313 = vrot.slane %v312, 2
          %v314 = vadd.f32 %v312, %v313
          %v315 = vrot.slane %v314, 1
          %v316 = vadd.f32 %v314, %v315
          %s317 = vtos %v316
          %v318 = vsel %vm218, %v282, 0.0
          %319 = vadd.xlane.f32.xlu0 %v318
          %v320 = vpop.xlane.xlu0 %319
          %v321 = vrot.slane %v320, 4
          %v322 = vadd.f32 %v320, %v321
          %v323 = vrot.slane %v322, 2
          %v324 = vadd.f32 %v322, %v323
          %v325 = vrot.slane %v324, 1
          %v326 = vadd.f32 %v324, %v325
          %s327 = vtos %v326
          %s328 = sadd.f32 %s317, %s327
          %s329 = smul.f32 %s328, 0.0625
          %vm330 = vcmp.eq.s32.totalorder %v207, 2
          %v331 = vstv %s307
          %v332 = vsel %vm330, %v331, 0.0
          %vm333 = vcmp.eq.s32.totalorder %v207, 3
          %v334 = vstv %s329
          %v335 = vsel %vm333, %v334, 0.0
          %v336 = vadd.f32 %v332, %v335
          %337 = vst [vmem:[%s4] sm:$0x1] %v336
        $region44: #{das_bl_forward.1} parent=35 // pred_fallthru
          _
        %v338 = vld [vmem:[#allocation2] sm:$0xf]
        %v339 = vld [vmem:[#allocation2 + $0x4] sm:$0xf]
        %v340 = vld [vmem:[%s183] sm:$0xf]
        %v341 = vld [vmem:[%s183 + $0x4] sm:$0xf]
        %v342 = vld [vmem:[%s183 + $0x8] sm:$0xf]
        %v343 = vld [vmem:[%s183 + $0xc] sm:$0xf]
        %v344 = vld [vmem:[%s183 + $0x10] sm:$0xf]
        %v345 = vld [vmem:[%s183 + $0x14] sm:$0xf]
        %v346 = vld [vmem:[%s183 + $0x18] sm:$0xf]
        %v347 = vld [vmem:[%s183 + $0x1c] sm:$0xf]
        %v348 = vld [vmem:[%s183 + $0x20] sm:$0xf]
        %v349 = vld [vmem:[%s183 + $0x24] sm:$0xf]
        %v350 = vld [vmem:[%s183 + $0x28] sm:$0xf]
        %v351 = vld [vmem:[%s183 + $0x2c] sm:$0xf]
        %v352 = vld [vmem:[%s183 + $0x30] sm:$0xf]
        %v353 = vld [vmem:[%s183 + $0x34] sm:$0xf]
        %v354 = vld [vmem:[%s183 + $0x38] sm:$0xf]
        %v355 = vld [vmem:[%s183 + $0x3c] sm:$0xf]
        %v358 = vunpack.c.l.b16 %v338
        %v359 = vunpack.c.l.b16 %v339
        %v360 = vpack.c.b16 %v359, %v358
        %v378 = vunpack.c.l.b16 %v340
        %v379 = vunpack.c.l.b16 %v341
        %v380 = vunpack.c.l.b16 %v342
        %v381 = vunpack.c.l.b16 %v343
        %v382 = vunpack.c.l.b16 %v344
        %v383 = vunpack.c.l.b16 %v345
        %v384 = vunpack.c.l.b16 %v346
        %v385 = vunpack.c.l.b16 %v347
        %v386 = vunpack.c.l.b16 %v348
        %v387 = vunpack.c.l.b16 %v349
        %v388 = vunpack.c.l.b16 %v350
        %v389 = vunpack.c.l.b16 %v351
        %v390 = vunpack.c.l.b16 %v352
        %v391 = vunpack.c.l.b16 %v353
        %v392 = vunpack.c.l.b16 %v354
        %v393 = vunpack.c.l.b16 %v355
        %v394 = vpack.c.b16 %v379, %v378
        %v395 = vpack.c.b16 %v381, %v380
        %v396 = vpack.c.b16 %v383, %v382
        %v397 = vpack.c.b16 %v385, %v384
        %v398 = vpack.c.b16 %v387, %v386
        %v399 = vpack.c.b16 %v389, %v388
        %v400 = vpack.c.b16 %v391, %v390
        %v401 = vpack.c.b16 %v393, %v392
        %410 = vmatpush.bf16.msra.mxu0 %v401
        %411 = vmatpush.bf16.msra.mxu0 %v400
        %412 = vmatpush.bf16.msra.mxu0 %v399
        %413 = vmatpush.bf16.msra.mxu0 %v398
        %414 = vmatpush.bf16.msra.mxu0 %v397
        %415 = vmatpush.bf16.msra.mxu0 %v396
        %416 = vmatpush.bf16.msra.mxu0 %v395
        %417 = vmatpush.bf16.msra.mxu0 %v394
        %418 = vmatmul.bf16.gmra.mxu0 %v360
        %v419 = vpop.f32.mrf.mxu0
        %v420 = vadd.f32 0.0, %v419
        %v421 = vpop.f32.mrf.mxu0
        %v422 = vadd.f32 0.0, %v421
        %423 = vdwg.mxu0
        %s424 = smul.u32 %s18, 128
        %v425 = vstv %s424
        %v426 = vadd.s32 %v207, %v425
        %v427 = vld [vmem:[#allocation3] sm:$0xff]
        %v428 = vld [vmem:[#allocation3 + $0x8] sm:$0xff]
        %429 = vmax.xlane.f32.xlu0 %v420
        %v430 = vpop.xlane.xlu0 %429
        %431 = vmax.xlane.f32.xlu0 %v422
        %v432 = vpop.xlane.xlu0 %431
        %vm433 = vcmp.ge.f32.partialorder %v420, %v430
        %vm434 = vcmp.ge.f32.partialorder %v422, %v432
        %v435 = vsel %vm433, %v426, 256
        %v436 = vsel %vm434, %v426, 256
        %v437 = vand.u32 %v435, 65535
        %v438 = vshra.s32 %v435, 16
        %v439 = vcvt.s32.f32 %v437
        %v440 = vcvt.s32.f32 %v438
        %441 = vmin.xlane.f32.xlu0 %v440
        %v442 = vpop.xlane.xlu0 %441
        %vm443 = vcmp.eq.f32.partialorder %v440, %v442
        %v444 = vsel %vm443, %v439, inf
        %445 = vmin.xlane.f32.xlu0 %v444
        %v446 = vpop.xlane.xlu0 %445
        %v447 = vcvt.f32.s32 %v446
        %v448 = vcvt.f32.s32 %v442
        %v449 = vshll.u32 %v448, 16
        %v450 = vadd.s32 %v449, %v447
        %v451 = vand.u32 %v436, 65535
        %v452 = vshra.s32 %v436, 16
        %v453 = vcvt.s32.f32 %v451
        %v454 = vcvt.s32.f32 %v452
        %455 = vmin.xlane.f32.xlu0 %v454
        %v456 = vpop.xlane.xlu0 %455
        %vm457 = vcmp.eq.f32.partialorder %v454, %v456
        %v458 = vsel %vm457, %v453, inf
        %459 = vmin.xlane.f32.xlu0 %v458
        %v460 = vpop.xlane.xlu0 %459
        %v461 = vcvt.f32.s32 %v460
        %v462 = vcvt.f32.s32 %v456
        %v463 = vshll.u32 %v462, 16
        %v464 = vadd.s32 %v463, %v461
        %vm465 = vcmp.gt.f32.partialorder %v430, %v427
        %vm466 = vcmp.gt.f32.partialorder %v432, %v428
        %v467 = vld [vmem:[#allocation6] sm:$0xff]
        %v468 = vld [vmem:[#allocation6 + $0x8] sm:$0xff]
        %v469 = vsel %vm465, %v450, %v467
        %v470 = vsel %vm466, %v464, %v468
        %vm471 = vcmask 7168
        %472 = vst.msk [vmem:[#allocation6] sm:$0xff] %vm471, %v469
        %473 = vst.msk [vmem:[#allocation6 + $0x8] sm:$0xff] %vm471, %v470
        %v474 = vmax.f32 %v427, %v430
        %v475 = vmax.f32 %v428, %v432
        %v476 = vld [vmem:[#allocation4] sm:$0xff]
        %v477 = vld [vmem:[#allocation4 + $0x8] sm:$0xff]
        %v478 = vsub.f32 %v427, %v474
        %v479 = vsub.f32 %v428, %v475
        %v480 = vmul.f32 %v478, 1.442695
        %v481 = vpow.pop %v480
        %v482 = vmul.f32 %v479, 1.442695
        %v483 = vpow.pop %v482
        %v484 = vmul.f32 %v476, %v481
        %v485 = vmul.f32 %v477, %v483
        %487 = vset.pattern.permute.xlu0 0
        %488 = vperm.xlu0 %487, %v474
        %v489 = vpop.permute.xlu0 %488
        %492 = vset.pattern.permute.xlu0 0
        %493 = vperm.xlu0 %492, %v475
        %v494 = vpop.permute.xlu0 %493
        %v496 = vsub.f32 %v420, %v489
        %v497 = vsub.f32 %v422, %v494
        %v498 = vmul.f32 %v496, 1.442695
        %v499 = vpow.pop %v498
        %v500 = vmul.f32 %v497, 1.442695
        %v501 = vpow.pop %v500
        %502 = vadd.xlane.f32.xlu0 %v499
        %v503 = vpop.xlane.xlu0 %502
        %504 = vadd.xlane.f32.xlu0 %v501
        %v505 = vpop.xlane.xlu0 %504
        %v506 = vadd.f32 %v484, %v503
        %v507 = vadd.f32 %v485, %v505
        %508 = vst.msk [vmem:[#allocation4] sm:$0xff] %vm471, %v506
        %509 = vst.msk [vmem:[#allocation4 + $0x8] sm:$0xff] %vm471, %v507
        %510 = vst.msk [vmem:[#allocation3] sm:$0xff] %vm471, %v474
        %511 = vst.msk [vmem:[#allocation3 + $0x8] sm:$0xff] %vm471, %v475
        %v512 = vld [vmem:[#allocation5] sm:$0xff]
        %v513 = vld [vmem:[#allocation5 + $0x8] sm:$0xff]
        %514 = vset.pattern.permute.xlu0 0
        %515 = vperm.xlu0 %514, %v204
        %v516 = vpop.permute.xlu0 %515
        %517 = vset.pattern.permute.xlu0 0
        %518 = vperm.xlu0 %517, %v205
        %v519 = vpop.permute.xlu0 %518
        %vm520 = vcmp.eq.s32.totalorder %v426, %v516
        %vm521 = vcmp.eq.s32.totalorder %v426, %v519
        %v522 = vsel %vm520, %v420, 0.0
        %v523 = vsel %vm521, %v422, 0.0
        %524 = vadd.xlane.f32.xlu0 %v522
        %v525 = vpop.xlane.xlu0 %524
        %526 = vadd.xlane.f32.xlu0 %v523
        %v527 = vpop.xlane.xlu0 %526
        %v528 = vadd.f32 %v512, %v525
        %v529 = vadd.f32 %v513, %v527
        %530 = vst.msk [vmem:[#allocation5] sm:$0xff] %vm471, %v528
        %531 = vst.msk [vmem:[#allocation5 + $0x8] sm:$0xff] %vm471, %v529
        %p532 = scmp.eq.s32.totalorder %s18, 1
        // Predicated region
        $region45: #{das_bl_forward.1} parent=35 // pred_check
          %p533 = pneg %p532
        $region46: #{das_bl_forward.1} parent=35 // pred_check_branch
          %535 = sbr.rel (%p533) target = $region48
        $region47: #{das_bl_forward.1} parent=35 // pred_region
          %v536 = vld [vmem:[#allocation4] sm:$0xff]
          %v537 = vld [vmem:[#allocation4 + $0x8] sm:$0xff]
          %v538 = vlog2.pop %v536
          %v539 = vmul.f32 %v538, 0.6931472
          %v540 = vlog2.pop %v537
          %v541 = vmul.f32 %v540, 0.6931472
          %v542 = vld [vmem:[#allocation3] sm:$0xff]
          %v543 = vld [vmem:[#allocation3 + $0x8] sm:$0xff]
          %v544 = vadd.f32 %v539, %v542
          %v545 = vadd.f32 %v541, %v543
          %v546 = vld [vmem:[#allocation5] sm:$0xff]
          %v547 = vld [vmem:[#allocation5 + $0x8] sm:$0xff]
          %v548 = vsub.f32 %v544, %v546
          %v549 = vsub.f32 %v545, %v547
          %v550 = vsel %vm471, %v548, 0.0
          %v551 = vsel %vm471, %v549, 0.0
          %v552 = vadd.f32 %v550, %v551
          %553 = vadd.xlane.f32.xlu0 %v552
          %v554 = vpop.xlane.xlu0 %553
          %v555 = vrot.slane %v554, 4
          %v556 = vadd.f32 %v554, %v555
          %v557 = vrot.slane %v556, 2
          %v558 = vadd.f32 %v556, %v557
          %v559 = vrot.slane %v558, 1
          %v560 = vadd.f32 %v558, %v559
          %s561 = vtos %v560
          %v562 = vrcp.pop 16.0
          %v563 = vmul.f32 16.0, %v562
          %v564 = vsub.f32 1.0, %v563
          %v565 = vmul.f32 %v562, %v564
          %v566 = vadd.f32 %v562, %v565
          %vm567 = vweird.f32 %v562
          %v568 = vsel %vm567, %v562, %v566
          %s569 = vtos %v568
          %s570 = smul.f32 %s561, %s569
          %v571 = vld [vmem:[#allocation6] sm:$0xff]
          %v572 = vld [vmem:[#allocation6 + $0x8] sm:$0xff]
          %vm573 = vcmp.eq.s32.totalorder %v571, %v204
          %vm574 = vcmp.eq.s32.totalorder %v572, %v205
          %v575 = vsel %vm573, 1, 0
          %v576 = vsel %vm574, 1, 0
          %v577 = vcvt.s32.f32 %v575
          %v578 = vcvt.s32.f32 %v576
          %v579 = vsel %vm471, %v577, 0.0
          %v580 = vsel %vm471, %v578, 0.0
          %v581 = vadd.f32 %v579, %v580
          %582 = vadd.xlane.f32.xlu0 %v581
          %v583 = vpop.xlane.xlu0 %582
          %v584 = vrot.slane %v583, 4
          %v585 = vadd.f32 %v583, %v584
          %v586 = vrot.slane %v585, 2
          %v587 = vadd.f32 %v585, %v586
          %v588 = vrot.slane %v587, 1
          %v589 = vadd.f32 %v587, %v588
          %s590 = vtos %v589
          %v591 = vrcp.pop 16.0
          %v592 = vmul.f32 16.0, %v591
          %v593 = vsub.f32 1.0, %v592
          %v594 = vmul.f32 %v591, %v593
          %v595 = vadd.f32 %v591, %v594
          %vm596 = vweird.f32 %v591
          %v597 = vsel %vm596, %v591, %v595
          %s598 = vtos %v597
          %s599 = smul.f32 %s590, %s598
          %s600 = smul.f32 %s599, 100.0
          %v601 = vld [vmem:[%s4] sm:$0x1]
          %vm602 = vcmp.eq.s32.totalorder %v207, 0
          %v603 = vstv %s570
          %v604 = vsel %vm602, %v603, 0.0
          %v605 = vadd.f32 %v601, %v604
          %vm606 = vcmp.eq.s32.totalorder %v207, 1
          %v607 = vstv %s600
          %v608 = vsel %vm606, %v607, 0.0
          %v609 = vadd.f32 %v605, %v608
          %610 = vst [vmem:[%s4] sm:$0x1] %v609
        $region48: #{das_bl_forward.1} parent=35 // pred_fallthru
          _
        // Predicated region
        $region49: #{das_bl_forward.1} parent=35 // pred_check
          %p611 = pneg %p120
        $region50: #{das_bl_forward.1} parent=35 // pred_check_branch
          %613 = sbr.rel (%p611) target = $region52
        $region51: #{das_bl_forward.1} parent=35 // pred_region
          _
        $region52: #{das_bl_forward.1} parent=35 // pred_fallthru
          _
        // Predicated region
        $region53: #{das_bl_forward.1} parent=35 // pred_check
          %p614 = pneg %p120
        $region54: #{das_bl_forward.1} parent=35 // pred_check_branch
          %616 = sbr.rel (%p614) target = $region56
        $region55: #{das_bl_forward.1} parent=35 // pred_region
          _
        $region56: #{das_bl_forward.1} parent=35 // pred_fallthru
          _
      $region36: #{das_bl_forward.1} parent=5 // pred_fallthru
        _
      %p617 = scmp.le.s32.totalorder 2, %s13
      // Predicated region
      $region57: #{das_bl_forward.1} parent=5 // pred_check
        %p618 = pneg %p617
      $region58: #{das_bl_forward.1} parent=5 // pred_check_branch
        %620 = sbr.rel (%p618) target = $region60
      $region59: #{das_bl_forward.1} parent=5 // pred_region
        %s621 = ssub.s32 %s13, 2
      $region60: #{das_bl_forward.1} parent=5 // pred_fallthru
        _
    $region6: #{das_bl_forward.1} parent=1 // loop_footer
      %s17 = sadd.s32 1, %s13
    $region7: #{das_bl_forward.1} parent=1 // loop_footer_branch
      %12 = sbr.rel target = $region3
    $region8: #{das_bl_forward.1} parent=1 // loop_exit
      _
    %622 = vsyncpa [#allocation8], 1
    %s623 = scalar_lea.sflag [#allocation8], 1
    %624 = vsyncpa %s623, 1

</llo_original>
